<compile_context>
chip_gen: v7x
topology: tpu7x:2x2x1
jax: 0.10.0
libtpu: 0.0.40
codegen_flags: <defaults>
</compile_context>

<pallas_src>
import jax
import jax.numpy as jnp
from jax.experimental import pallas as pl
from jax.experimental.pallas import tpu as pltpu

_LANE_CHOICES = (1024, 512, 256, 128)  # widest lane count that divides the size
_TARGET_TILE_ELEMS = 1 << 20           # ~4 MiB f32 / ~2 MiB bf16 per buffer


def _h_swish_kernel(x_ref, o_ref):
    # x_ref / o_ref: (block_rows, lane) tile in VMEM.
    x = x_ref[...].astype(jnp.float32)
    # h_sigmoid(x) = relu6(x + 3) / 6  ->  clip(x + 3, 0, 6) * (1/6)   (pure VPU)
    h_sig = jnp.clip(x + 3.0, 0.0, 6.0) * (1.0 / 6.0)
    o_ref[...] = (x * h_sig).astype(o_ref.dtype)


def h_swish(x):
    """Elementwise h_swish for an arbitrary-shaped array (matches the PyTorch module)."""
    orig_shape = x.shape
    orig_dtype = x.dtype
    total = int(x.size)
    if total == 0:
        return x

    flat = x.reshape(-1)

    # Pick the widest lane count that divides the element count exactly
    # (no padding, no extra HBM copy). Fall back to a minimal pad to 128.
    lane = next((c for c in _LANE_CHOICES if total % c == 0), None)
    pad = 0
    if lane is None:
        lane = 128
        pad = (-total) % lane
        flat = jnp.pad(flat, (0, pad))

    rows = (total + pad) // lane
    x2d = flat.reshape(rows, lane)

    # Rows per tile: multiple of 32 (covers f32/bf16/int8 sublane packing),
    # sized so one buffer is ~4 MiB in f32. If the whole slab fits a single
    # tile, use the exact row count (block dim == full array dim is allowed).
    max_rows = max(32, (_TARGET_TILE_ELEMS // lane) // 32 * 32)
    block_rows = rows if rows <= max_rows else max_rows
    grid = (pl.cdiv(rows, block_rows),)

    out2d = pl.pallas_call(
        _h_swish_kernel,
        out_shape=jax.ShapeDtypeStruct((rows, lane), orig_dtype),
        grid_spec=pltpu.PrefetchScalarGridSpec(
            num_scalar_prefetch=0,
            grid=grid,
            in_specs=[pl.BlockSpec((block_rows, lane), lambda i: (i, 0))],
            out_specs=pl.BlockSpec((block_rows, lane), lambda i: (i, 0)),
        ),
        compiler_params=pltpu.CompilerParams(
            # Independent tiles -> megacore sharding on v7x; neutral on v5e/v6e.
            dimension_semantics=("parallel",),
            # Double-buffered ~4 MiB in + ~4 MiB out uses ~16 MiB; this limit
            # is valid on every generation (v7x scoped default is 32 MiB).
            vmem_limit_bytes=32 * 1024 * 1024,
        ),
    )(x2d)

    out_flat = out2d.reshape(-1)
    if pad:
        out_flat = out_flat[:total]
    return out_flat.reshape(orig_shape)


def _reference(x):
    xf = x.astype(jnp.float32)
    y = xf * (jnp.clip(xf + 3.0, 0.0, 6.0) * (1.0 / 6.0))
    return y.astype(x.dtype)


if __name__ == "__main__":
    key = jax.random.PRNGKey(0)
    k1, k2, k3, k4 = jax.random.split(key, 4)

    # Small shape consistent with the module (NCHW activation tensor).
    x_small = jax.random.normal(k1, (2, 4, 16, 16), dtype=jnp.float32) * 3.0
    out_small = jax.block_until_ready(h_swish(x_small))
    assert out_small.shape == x_small.shape, out_small.shape
    assert jnp.allclose(out_small, _reference(x_small), atol=1e-5, rtol=1e-5), (
        float(jnp.max(jnp.abs(out_small - _reference(x_small)))))

    # Larger shape: multi-tile grid with a ragged last block (no padding pass).
    x_big = jax.random.normal(k2, (8, 128, 40, 40), dtype=jnp.float32) * 3.0
    out_big = jax.block_until_ready(h_swish(x_big))
    assert out_big.shape == x_big.shape, out_big.shape
    assert jnp.allclose(out_big, _reference(x_big), atol=1e-5, rtol=1e-5), (
        float(jnp.max(jnp.abs(out_big - _reference(x_big)))))

    # Odd element count: exercises the minimal-padding fallback path.
    x_odd = jax.random.normal(k3, (3, 5, 7, 11), dtype=jnp.float32) * 3.0
    out_odd = jax.block_until_ready(h_swish(x_odd))
    assert out_odd.shape == x_odd.shape, out_odd.shape
    assert jnp.allclose(out_odd, _reference(x_odd), atol=1e-5, rtol=1e-5), (
        float(jnp.max(jnp.abs(out_odd - _reference(x_odd)))))

    # bf16 input: halved HBM traffic; compute still in f32 inside the kernel.
    x_bf16 = (jax.random.normal(k4, (2, 8, 20, 20), dtype=jnp.float32) * 3.0
              ).astype(jnp.bfloat16)
    out_bf16 = jax.block_until_ready(h_swish(x_bf16))
    assert out_bf16.shape == x_bf16.shape, out_bf16.shape
    assert jnp.allclose(out_bf16.astype(jnp.float32),
                        _reference(x_bf16).astype(jnp.float32),
                        atol=3e-2, rtol=3e-2)

    print("KERNEL_OK")
</pallas_src>

<mosaic_0001>
module attributes {stable_mosaic.version = 11 : i64} {
  func.func @_h_swish_kernel(%arg0: i32, %arg1: memref<2x1024xf32, #tpu.memory_space<vmem>>, %arg2: memref<2x1024xf32, #tpu.memory_space<vmem>>) attributes {dimension_semantics = [#tpu.dimension_semantics<parallel>], iteration_bounds = array<i64: 1>, scalar_prefetch = 0 : i64, scratch_operands = 0 : i64, tpu.core_type = #tpu.core_type<tc>, window_params = [{transform_indices = @transform_0, window_bounds = array<i64: 2, 1024>}, {transform_indices = @transform_1, window_bounds = array<i64: 2, 1024>}]} {
    %c0 = arith.constant 0 : index
    %c0_0 = arith.constant 0 : index
    %0 = vector.load %arg1[%c0, %c0_0] : memref<2x1024xf32, #tpu.memory_space<vmem>>, vector<2x1024xf32>
    %cst = arith.constant 3.000000e+00 : f32
    %1 = vector.broadcast %cst : f32 to vector<2x1024xf32>
    %2 = arith.addf %0, %1 : vector<2x1024xf32>
    %cst_1 = arith.constant 0.000000e+00 : f32
    %cst_2 = arith.constant 6.000000e+00 : f32
    %3 = vector.broadcast %cst_1 : f32 to vector<2x1024xf32>
    %4 = arith.maximumf %3, %2 : vector<2x1024xf32>
    %5 = vector.broadcast %cst_2 : f32 to vector<2x1024xf32>
    %6 = arith.minimumf %5, %4 : vector<2x1024xf32>
    %cst_3 = arith.constant 0.166666672 : f32
    %7 = vector.broadcast %cst_3 : f32 to vector<2x1024xf32>
    %8 = arith.mulf %6, %7 : vector<2x1024xf32>
    %9 = arith.mulf %0, %8 : vector<2x1024xf32>
    %c0_4 = arith.constant 0 : index
    %c0_5 = arith.constant 0 : index
    %10 = vector.load %arg2[%c0_4, %c0_5] : memref<2x1024xf32, #tpu.memory_space<vmem>>, vector<2x1024xf32>
    tpu.vector_store %arg2[%c0_4, %c0_5], %9 {strides = array<i32>} : memref<2x1024xf32, #tpu.memory_space<vmem>>, vector<2x1024xf32>,
    return
  }
  func.func @transform_0(%arg0: i32) -> (i32, i32) {
    %c0_i32 = arith.constant 0 : i32
    %c0_i32_0 = arith.constant 0 : i32
    return %arg0, %c0_i32 : i32, i32
  }
  func.func @transform_1(%arg0: i32) -> (i32, i32) {
    %c0_i32 = arith.constant 0 : i32
    %c0_i32_0 = arith.constant 0 : i32
    return %arg0, %c0_i32 : i32, i32
  }
}

</mosaic_0001>

<llo_original>
// kernel: tpu_custom_call.1
$region0: #{tpu_custom_call.1}
  #allocation0 [shape = 'u32[]', space=smem, size = 0x4, offset = 0x4, fixed_abs, tag = 'smem constant byte address 0x4 - core index']
  #allocation1 [shape = 'u32[144,128]{1,0:T(1,128)}', space=vmem, size = 0x12000, scoped, tag = 'internal scratch']
  %s0 = inlined_call_operand.hbm [shape: f32[2,1024], index: 0, kind: input, shape index: {}]
  %s1 = inlined_call_operand.hbm [shape: f32[2,1024], index: 1, kind: output, shape index: {}]
  %s2 = sld [smem:[#allocation0]]
  $region18: #{tpu_custom_call.1} parent=0
    _
  %s4 = ssub.s32 1, %s2
  %s5 = scalar_select 0, %s4, %s2
  $region1: #{tpu_custom_call.1} parent=0
    #allocation2 [shape = 'u8[8192]{0}', space=vmem, size = 0x2000, scoped, tag = 'input window, operand 0, single buffered']
    #allocation3 [shape = 's32[1]{0}', space=sflag, size = 0x4, scoped, tag = 'scoped memory for tpu_custom_call.1']
    #allocation4 [shape = 's32[1]{0}', space=sflag, size = 0x4, scoped, tag = 'scoped memory for tpu_custom_call.1']
    #allocation5 [shape = 'u8[8192]{0}', space=vmem, size = 0x2000, scoped, tag = 'output window, operand 0, single buffered']
    %6 = vsyncpa [#allocation3], 0
    %7 = vsyncpa [#allocation4], 0
    // Predicated region
    $region2: #{tpu_custom_call.1} parent=1 // pred_check
      _
    $region3: #{tpu_custom_call.1} parent=1 // pred_check_branch
      %9 = sbr.rel (0) target = $region5
    $region4: #{tpu_custom_call.1} parent=1 // pred_region
      %s11 = ssub.s32 256, 256
      %12 = vsyncadd [#allocation3], %s11
      %s14 = sshll.u32 [#allocation2], 4
      %s15 = int_to_ptr.vmem [resolvable:$true] %s14
      %17 = dma.hbm_to_vmem [thread:$0]  %s0, 256, %s15, [#allocation3]
    $region5: #{tpu_custom_call.1} parent=1 // pred_fallthru
      _
    // Predicated region
    $region6: #{tpu_custom_call.1} parent=1 // pred_check
      _
    $region7: #{tpu_custom_call.1} parent=1 // pred_check_branch
      %19 = sbr.rel (0) target = $region9
    $region8: #{tpu_custom_call.1} parent=1 // pred_region
      %20 = dma.done [#allocation3], 256
    $region9: #{tpu_custom_call.1} parent=1 // pred_fallthru
      _
    %v21 = vld [vmem:[#allocation2] sm:$0xff]
    %v22 = vld [vmem:[#allocation2 + $0x8] sm:$0xff]
    %v23 = vadd.f32 %v21, 3.0
    %v24 = vadd.f32 %v22, 3.0
    %v25 = vmax.f32 %v23, 0.0
    %v26 = vmax.f32 %v24, 0.0
    %v27 = vmin.f32 %v25, 6.0
    %v28 = vmin.f32 %v26, 6.0
    %v29 = vmul.f32 %v27, 0.16666667
    %v30 = vmul.f32 %v28, 0.16666667
    %v31 = vmul.f32 %v21, %v29
    %v32 = vmul.f32 %v22, %v30
    %33 = vst [vmem:[#allocation5] sm:$0xff] %v31
    %34 = vst [vmem:[#allocation5 + $0x8] sm:$0xff] %v32
    // Predicated region
    $region10: #{tpu_custom_call.1} parent=1 // pred_check
      _
    $region11: #{tpu_custom_call.1} parent=1 // pred_check_branch
      %36 = sbr.rel (0) target = $region13
    $region12: #{tpu_custom_call.1} parent=1 // pred_region
      %s38 = ssub.s32 256, 256
      %39 = vsyncadd [#allocation4], %s38
      %s41 = sshll.u32 [#allocation5], 4
      %s42 = int_to_ptr.vmem [resolvable:$true] %s41
      %44 = dma.vmem_to_hbm [thread:$0]  %s42, 256, %s1, [#allocation4]
    $region13: #{tpu_custom_call.1} parent=1 // pred_fallthru
      _
    // Predicated region
    $region14: #{tpu_custom_call.1} parent=1 // pred_check
      _
    $region15: #{tpu_custom_call.1} parent=1 // pred_check_branch
      %46 = sbr.rel (0) target = $region17
    $region16: #{tpu_custom_call.1} parent=1 // pred_region
      %47 = dma.done [#allocation4], 256
    $region17: #{tpu_custom_call.1} parent=1 // pred_fallthru
      _
    %48 = vsyncpa [#allocation3], 1
    %49 = vsyncpa [#allocation4], 1

</llo_original>
